<compile_context>
chip_gen: v7x
topology: tpu7x:2x2x1
jax: 0.10.0
libtpu: 0.0.40
codegen_flags: <defaults>
</compile_context>

<pallas_src>
import functools
import math

import jax
import jax.numpy as jnp
from jax.experimental import pallas as pl
from jax.experimental.pallas import tpu as pltpu


# --------------------------------------------------------------------------- #
# Kernel: broadcast multiply of a row tile by a resident (1, F) gate vector.  #
# --------------------------------------------------------------------------- #
def _gate_mul_kernel(gate_ref, x_ref, o_ref):
    """gate_ref: (1, F) in x's dtype (resident); x_ref / o_ref: (TR, F)."""
    o_ref[...] = (x_ref[...] * gate_ref[...]).astype(o_ref.dtype)


# --------------------------------------------------------------------------- #
# Parameter-side gate math (tiny: O(num_heads)); hoisted out of the kernel.   #
# --------------------------------------------------------------------------- #
def _compute_gate(log_a, *, temperature, lo, hi, training, rand, u_eps=1e-6):
    log_a = log_a.astype(jnp.float32)
    if training:
        assert rand is not None and rand.shape == log_a.shape
        # Clamp u away from {0,1} so log() stays finite (matches torch.rand's
        # open-interval semantics; harmless for valid uniform samples).
        u = jnp.clip(rand.astype(jnp.float32), u_eps, 1.0 - u_eps)
        logits = (jnp.log(u) - jnp.log(1.0 - u) + log_a) / temperature
    else:
        logits = log_a
    gate = jax.nn.sigmoid(logits)
    gate = gate * (hi - lo) + lo
    return jnp.clip(gate, 0.0, 1.0)


# --------------------------------------------------------------------------- #
# Wrapper                                                                      #
# --------------------------------------------------------------------------- #
def hard_concrete_gate(x, log_a, *, temperature=0.5, adjust_range=(-0.1, 1.1),
                       training=False, rand=None,
                       target_block_bytes=4 << 20, min_grid_steps=2,
                       donate_input=False):
    """Forward pass of HardConcreteGate.

    x:      (..., F) with F % num_heads == 0 (feature / gated axis last)
    log_a:  (num_heads,) parameter
    rand:   (num_heads,) uniform(0,1) sample (only used when training=True)
    donate_input: alias x's buffer to the output (only if caller no longer
                  needs x) -- halves peak HBM footprint for large activations.
    """
    num_heads = log_a.shape[0]
    feat = x.shape[-1]
    assert feat % num_heads == 0
    rep = feat // num_heads

    lo, hi = float(adjust_range[0]), float(adjust_range[1])

    # Gate vector (sigmoid -> affine -> clip) computed once on the tiny
    # parameter, then repeat_interleaved to feature width.
    gate = _compute_gate(log_a, temperature=float(temperature), lo=lo, hi=hi,
                         training=training, rand=rand)
    gate_rep = jnp.repeat(gate, rep)                               # (F,) f32

    # Keep the in-kernel multiply in x's dtype (bf16 VALU native on v6e/v7x);
    # f32 inputs keep an f32 gate.
    gate_dtype = x.dtype if jnp.issubdtype(x.dtype, jnp.floating) else jnp.float32
    gate2 = gate_rep[None, :].astype(gate_dtype)                   # (1, F)

    # Flatten leading dims to rows.
    lead = x.shape[:-1]
    n_rows = math.prod(lead) if lead else 1
    if n_rows == 0 or feat == 0:
        return x                                                   # empty: nothing to gate
    x2 = x.reshape(n_rows, feat)

    # Row tile: ~target_block_bytes per x tile, aligned to the sublane tile for
    # the dtype (8 for f32, 16 for bf16, 32 for int8).
    itemsize = jnp.dtype(x.dtype).itemsize
    sublane = max(8, 32 // itemsize)
    tile_rows = max(sublane, target_block_bytes // (feat * itemsize))
    tile_rows = (tile_rows // sublane) * sublane
    # Cap so the grid has >= min_grid_steps steps: the 'parallel' axis shards
    # across v7x's 2 TensorCores; costs at most one extra ~0.35us step on
    # single-TC chips.
    cap = max(sublane,
              pl.cdiv(pl.cdiv(n_rows, min_grid_steps), sublane) * sublane)
    tile_rows = min(tile_rows, cap)

    # No row/lane padding: the last block may be ragged (masked stores) and a
    # non-128-multiple feature width just uses the full array extent.
    grid = (pl.cdiv(n_rows, tile_rows),)

    extra = {}
    if donate_input:
        extra["input_output_aliases"] = {1: 0}   # alias x2 -> output

    out = pl.pallas_call(
        _gate_mul_kernel,
        out_shape=jax.ShapeDtypeStruct((n_rows, feat), x.dtype),
        grid_spec=pltpu.PrefetchScalarGridSpec(
            num_scalar_prefetch=0,
            grid=grid,
            in_specs=[
                pl.BlockSpec((1, feat), lambda i: (0, 0)),            # gate (resident)
                pl.BlockSpec((tile_rows, feat), lambda i: (i, 0)),    # x row tile
            ],
            out_specs=pl.BlockSpec((tile_rows, feat), lambda i: (i, 0)),
        ),
        compiler_params=pltpu.CompilerParams(
            dimension_semantics=("parallel",),
            vmem_limit_bytes=32 * 1024 * 1024),   # 4 MiB x 4 buffers fits on v5e too
        **extra,
    )(gate2, x2)

    return out.reshape(x.shape)


# --------------------------------------------------------------------------- #
# Pure-JAX reference mirroring the PyTorch forward.                           #
# --------------------------------------------------------------------------- #
def _reference(x, log_a, *, temperature, adjust_range, training, rand):
    num_heads = log_a.shape[0]
    rep = x.shape[-1] // num_heads
    if training:
        concrete = jax.nn.sigmoid(
            (jnp.log(rand) - jnp.log(1.0 - rand) + log_a) / temperature)
    else:
        concrete = jax.nn.sigmoid(log_a)
    concrete = concrete * (adjust_range[1] - adjust_range[0]) + adjust_range[0]
    concrete = jnp.clip(concrete, 0.0, 1.0)
    concrete = jnp.repeat(concrete, rep)
    return x * concrete


if __name__ == "__main__":
    key = jax.random.PRNGKey(0)
    k_x, k_u, k_odd, k_bf = jax.random.split(key, 4)

    num_heads = 4
    temperature = 0.5
    adjust_range = (-0.1, 1.1)
    log_a = jnp.zeros((num_heads,), dtype=jnp.float32)             # nn.Parameter init
    rand = jax.random.uniform(k_u, (num_heads,), dtype=jnp.float32,
                              minval=1e-6, maxval=1.0 - 1e-6)      # random_buffer

    # --- Case 1: f32, feat=128, 16 rows -> 2 grid steps ---------------------
    x = jax.random.normal(k_x, (2, 8, num_heads * 32), dtype=jnp.float32)

    out_eval = hard_concrete_gate(x, log_a, temperature=temperature,
                                  adjust_range=adjust_range, training=False)
    jax.block_until_ready(out_eval)
    out_train = hard_concrete_gate(x, log_a, temperature=temperature,
                                   adjust_range=adjust_range,
                                   training=True, rand=rand)
    jax.block_until_ready(out_train)

    ref_eval = _reference(x, log_a, temperature=temperature,
                          adjust_range=adjust_range, training=False, rand=rand)
    ref_train = _reference(x, log_a, temperature=temperature,
                           adjust_range=adjust_range, training=True, rand=rand)
    assert jnp.allclose(out_eval, ref_eval, atol=1e-5, rtol=1e-5)
    assert jnp.allclose(out_train, ref_train, atol=1e-5, rtol=1e-5)

    # --- Case 2: ragged rows (15) + feat not a multiple of 128 (96) ----------
    x_odd = jax.random.normal(k_odd, (3, 5, num_heads * 24), dtype=jnp.float32)
    out_odd = hard_concrete_gate(x_odd, log_a, temperature=temperature,
                                 adjust_range=adjust_range, training=False)
    jax.block_until_ready(out_odd)
    ref_odd = _reference(x_odd, log_a, temperature=temperature,
                         adjust_range=adjust_range, training=False, rand=rand)
    assert jnp.allclose(out_odd, ref_odd, atol=1e-5, rtol=1e-5)

    # --- Case 3: bf16 activations (gate kept in bf16 -> native bf16 VALU) ----
    x_bf = jax.random.normal(k_bf, (2, 8, num_heads * 32),
                             dtype=jnp.float32).astype(jnp.bfloat16)
    out_bf = hard_concrete_gate(x_bf, log_a, temperature=temperature,
                                adjust_range=adjust_range, training=False)
    jax.block_until_ready(out_bf)
    ref_bf = _reference(x_bf.astype(jnp.float32), log_a, temperature=temperature,
                        adjust_range=adjust_range, training=False, rand=rand)
    assert jnp.allclose(out_bf.astype(jnp.float32), ref_bf, atol=5e-2, rtol=5e-2)

    print("KERNEL_OK")
</pallas_src>

<mosaic_0001>
module attributes {stable_mosaic.version = 11 : i64} {
  func.func @_gate_mul_kernel(%arg0: i32, %arg1: memref<1x128xf32, #tpu.memory_space<vmem>>, %arg2: memref<8x128xf32, #tpu.memory_space<vmem>>, %arg3: memref<8x128xf32, #tpu.memory_space<vmem>>) attributes {dimension_semantics = [#tpu.dimension_semantics<parallel>], iteration_bounds = array<i64: 2>, scalar_prefetch = 0 : i64, scratch_operands = 0 : i64, tpu.core_type = #tpu.core_type<tc>, window_params = [{pipeline_mode = #tpu.pipeline_mode<synchronous>, transform_indices = @transform_0, window_bounds = array<i64: 1, 128>}, {transform_indices = @transform_1, window_bounds = array<i64: 8, 128>}, {transform_indices = @transform_2, window_bounds = array<i64: 8, 128>}]} {
    %c0 = arith.constant 0 : index
    %c0_0 = arith.constant 0 : index
    %0 = vector.load %arg2[%c0, %c0_0] : memref<8x128xf32, #tpu.memory_space<vmem>>, vector<8x128xf32>
    %c0_1 = arith.constant 0 : index
    %c0_2 = arith.constant 0 : index
    %1 = vector.load %arg1[%c0_1, %c0_2] : memref<1x128xf32, #tpu.memory_space<vmem>>, vector<1x128xf32>
    %2 = vector.broadcast %1 : vector<1x128xf32> to vector<8x128xf32>
    %3 = arith.mulf %0, %2 : vector<8x128xf32>
    %c0_3 = arith.constant 0 : index
    %c0_4 = arith.constant 0 : index
    %4 = vector.load %arg3[%c0_3, %c0_4] : memref<8x128xf32, #tpu.memory_space<vmem>>, vector<8x128xf32>
    tpu.vector_store %arg3[%c0_3, %c0_4], %3 {strides = array<i32>} : memref<8x128xf32, #tpu.memory_space<vmem>>, vector<8x128xf32>,
    return
  }
  func.func @transform_0(%arg0: i32) -> (i32, i32) {
    %c0_i32 = arith.constant 0 : i32
    %c0_i32_0 = arith.constant 0 : i32
    %c0_i32_1 = arith.constant 0 : i32
    return %c0_i32, %c0_i32_0 : i32, i32
  }
  func.func @transform_1(%arg0: i32) -> (i32, i32) {
    %c0_i32 = arith.constant 0 : i32
    %c0_i32_0 = arith.constant 0 : i32
    return %arg0, %c0_i32 : i32, i32
  }
  func.func @transform_2(%arg0: i32) -> (i32, i32) {
    %c0_i32 = arith.constant 0 : i32
    %c0_i32_0 = arith.constant 0 : i32
    return %arg0, %c0_i32 : i32, i32
  }
}

</mosaic_0001>

<llo_original>
// kernel: tpu_custom_call.1
$region0: #{tpu_custom_call.1}
  #allocation0 [shape = 'u32[]', space=smem, size = 0x4, offset = 0x4, fixed_abs, tag = 'smem constant byte address 0x4 - core index']
  #allocation1 [shape = 'u32[144,128]{1,0:T(1,128)}', space=vmem, size = 0x12000, scoped, tag = 'internal scratch']
  %s0 = inlined_call_operand.hbm [shape: f32[1,128], index: 0, kind: input, shape index: {}]
  %s1 = inlined_call_operand.hbm [shape: f32[16,128], index: 1, kind: input, shape index: {}]
  %s2 = inlined_call_operand.hbm [shape: f32[16,128], index: 2, kind: output, shape index: {}]
  %s3 = sld [smem:[#allocation0]]
  $region49: #{tpu_custom_call.1} parent=0
    _
  %s5 = ssub.s32 1, %s3
  %s6 = scalar_select 0, %s5, %s3
  $region1: #{tpu_custom_call.1} parent=0
    #allocation2 [shape = 'u8[512]{0}', space=vmem, size = 0x400, scoped, tag = 'input window, operand 0, single buffered']
    #allocation3 [shape = 's32[2]{0}', space=sflag, size = 0x8, scoped, tag = 'scoped memory for tpu_custom_call.1']
    #allocation4 [shape = 's32[2]{0}', space=sflag, size = 0x8, scoped, tag = 'scoped memory for tpu_custom_call.1']
    #allocation5 [shape = 'u8[8192]{0}', space=vmem, size = 0x2000, scoped, tag = 'input window, operand 1']
    #allocation6 [shape = 's32[2]{0}', space=sflag, size = 0x8, scoped, tag = 'scoped memory for tpu_custom_call.1']
    #allocation7 [shape = 'u8[8192]{0}', space=vmem, size = 0x2000, scoped, tag = 'output window, operand 0']
    %7 = vsyncpa [#allocation3], 0
    %8 = vsyncpa [#allocation6], 0
    %s9 = scalar_lea.sflag [#allocation6], 1
    %10 = vsyncpa %s9, 0
    %11 = vsyncpa [#allocation4], 0
    %s12 = scalar_lea.sflag [#allocation4], 1
    %13 = vsyncpa %s12, 0
    loop: start=0, step=1, limit=4
    $region2: #{tpu_custom_call.1} parent=1 // loop_pre_header
      _
    $region3: #{tpu_custom_call.1} parent=1 // loop_header
      %s15 = sphi 0, %s19
      %p16 = scmp.ge.s32.totalorder %s15, 4
      %s23 = sphi 0, %s23
      %s25 = sphi 0, %s23
      %s26 = sphi 0, %s25
      %s40 = sphi 0, %s26
      %s46 = sphi 0, %s48
      %s49 = sphi 0, %s46
      %s50 = sphi 0, %s49
      %s66 = sphi 0, %s50
      %s72 = sphi 0, %s74
      %s75 = sphi 0, %s72
      %s76 = sphi 0, %s75
      %s92 = sphi 0, %s76
    $region4: #{tpu_custom_call.1} parent=1 // loop_header_branch
      %18 = sbr.rel (%p16) target = $region8
    $region5: #{tpu_custom_call.1} parent=1 // loop_body
      %s20 = ssub.s32 %s15, 1
      %s21 = ssub.s32 %s15, 2
      %s22 = sadd.s32 %s15, 1
      %s24 = sadd.s32 %s23, 1
      %p27 = scmp.eq.s32.totalorder %s15, 1
      %p28 = scmp.ne.s32.totalorder %s23, %s25
      %p29 = scmp.eq.s32.totalorder %s15, 0
      %p30 = por %p28, %p29
      %p31 = scmp.ne.s32.totalorder %s23, %s25
      %p32 = scmp.eq.s32.totalorder %s20, 1
      %p33 = por %p31, %p32
      %p34 = scmp.ne.s32.totalorder %s25, %s26
      %p35 = scmp.eq.s32.totalorder %s20, 0
      %p36 = por %p34, %p35
      %p37 = scmp.ne.s32.totalorder %s25, %s26
      %p38 = scmp.eq.s32.totalorder %s21, 1
      %p39 = por %p37, %p38
      %p41 = scmp.ne.s32.totalorder %s26, %s40
      %p42 = scmp.eq.s32.totalorder %s21, 0
      %p43 = por %p41, %p42
      %s44 = ssub.s32 %s15, %s22
      %p45 = scmp.eq.s32.totalorder %s44, 0
      %s47 = sadd.s32 %s46, 1
      %s48 = scalar_select %p45, %s46, %s47
      %p51 = pneg %p45
      %p52 = scmp.eq.s32.totalorder %s15, 1
      %p53 = por %p51, %p52
      %p54 = scmp.ne.s32.totalorder %s46, %s49
      %p55 = scmp.eq.s32.totalorder %s15, 0
      %p56 = por %p54, %p55
      %p57 = scmp.ne.s32.totalorder %s46, %s49
      %p58 = scmp.eq.s32.totalorder %s20, 1
      %p59 = por %p57, %p58
      %p60 = scmp.ne.s32.totalorder %s49, %s50
      %p61 = scmp.eq.s32.totalorder %s20, 0
      %p62 = por %p60, %p61
      %p63 = scmp.ne.s32.totalorder %s49, %s50
      %p64 = scmp.eq.s32.totalorder %s21, 1
      %p65 = por %p63, %p64
      %p67 = scmp.ne.s32.totalorder %s50, %s66
      %p68 = scmp.eq.s32.totalorder %s21, 0
      %p69 = por %p67, %p68
      %s70 = ssub.s32 %s15, %s22
      %p71 = scmp.eq.s32.totalorder %s70, 0
      %s73 = sadd.s32 %s72, 1
      %s74 = scalar_select %p71, %s72, %s73
      %p77 = pneg %p71
      %p78 = scmp.eq.s32.totalorder %s15, 1
      %p79 = por %p77, %p78
      %p80 = scmp.ne.s32.totalorder %s72, %s75
      %p81 = scmp.eq.s32.totalorder %s15, 0
      %p82 = por %p80, %p81
      %p83 = scmp.ne.s32.totalorder %s72, %s75
      %p84 = scmp.eq.s32.totalorder %s20, 1
      %p85 = por %p83, %p84
      %p86 = scmp.ne.s32.totalorder %s75, %s76
      %p87 = scmp.eq.s32.totalorder %s20, 0
      %p88 = por %p86, %p87
      %p89 = scmp.ne.s32.totalorder %s75, %s76
      %p90 = scmp.eq.s32.totalorder %s21, 1
      %p91 = por %p89, %p90
      %p93 = scmp.ne.s32.totalorder %s76, %s92
      %p94 = scmp.eq.s32.totalorder %s21, 0
      %p95 = por %p93, %p94
      %p96 = scmp.le.s32.totalorder 1, %s15
      %p97 = scmp.lt.s32.totalorder %s15, 3
      %p98 = pnand %p96, %p97
      %p99 = pneg %p98
      // Predicated region
      $region9: #{tpu_custom_call.1} parent=5 // pred_check
        _
      $region10: #{tpu_custom_call.1} parent=5 // pred_check_branch
        %101 = sbr.rel (%p98) target = $region12
      $region11: #{tpu_custom_call.1} parent=5 // pred_region
        %s102 = ssub.s32 %s15, 1
        // Predicated region
        $region13: #{tpu_custom_call.1} parent=11 // pred_check
          %p103 = pneg %p36
        $region14: #{tpu_custom_call.1} parent=11 // pred_check_branch
          %105 = sbr.rel (%p103) target = $region16
        $region15: #{tpu_custom_call.1} parent=11 // pred_region
          %s107 = ssub.s32 16, 16
          %108 = vsyncadd [#allocation3], %s107
          %s110 = sshll.u32 [#allocation2], 4
          %s111 = int_to_ptr.vmem [resolvable:$true] %s110
          %113 = dma.hbm_to_vmem [thread:$0]  %s0, 16, %s111, [#allocation3]
        $region16: #{tpu_custom_call.1} parent=11 // pred_fallthru
          _
      $region12: #{tpu_custom_call.1} parent=5 // pred_fallthru
        _
      %p114 = scmp.lt.s32.totalorder %s15, 2
      // Predicated region
      $region17: #{tpu_custom_call.1} parent=5 // pred_check
        %p115 = pneg %p114
      $region18: #{tpu_custom_call.1} parent=5 // pred_check_branch
        %117 = sbr.rel (%p115) target = $region20
      $region19: #{tpu_custom_call.1} parent=5 // pred_region
        // Predicated region
        $region21: #{tpu_custom_call.1} parent=19 // pred_check
          %p118 = pneg %p56
        $region22: #{tpu_custom_call.1} parent=19 // pred_check_branch
          %120 = sbr.rel (%p118) target = $region24
        $region23: #{tpu_custom_call.1} parent=19 // pred_region
          %s121 = sand.u32 %s46, 1
          %s122 = scalar_lea.sflag [#allocation6], %s121
          %s123 = sand.u32 %s46, 1
          %s124 = smul.addr %s123, 8
          %s125 = scalar_lea.vmem [#allocation5], %s124
          %s127 = ssub.s32 128, 128
          %128 = vsyncadd %s122, %s127
          %s129 = smul.addr %s15, 128
          %s130 = scalar_lea.hbm %s1, %s129
          %s132 = sshll.u32 %s125, 4
          %s133 = int_to_ptr.vmem [resolvable:$true] %s132
          %135 = dma.hbm_to_vmem [thread:$0]  %s130, 128, %s133, %s122
        $region24: #{tpu_custom_call.1} parent=19 // pred_fallthru
          _
      $region20: #{tpu_custom_call.1} parent=5 // pred_fallthru
        _
      %p136 = scmp.le.s32.totalorder 1, %s15
      %p137 = scmp.lt.s32.totalorder %s15, 3
      %p138 = pnand %p136, %p137
      %p139 = pneg %p138
      // Predicated region
      $region25: #{tpu_custom_call.1} parent=5 // pred_check
        _
      $region26: #{tpu_custom_call.1} parent=5 // pred_check_branch
        %141 = sbr.rel (%p138) target = $region28
      $region27: #{tpu_custom_call.1} parent=5 // pred_region
        %s142 = ssub.s32 %s15, 1
        // Predicated region
        $region29: #{tpu_custom_call.1} parent=27 // pred_check
          %p143 = pneg %p36
        $region30: #{tpu_custom_call.1} parent=27 // pred_check_branch
          %145 = sbr.rel (%p143) target = $region32
        $region31: #{tpu_custom_call.1} parent=27 // pred_region
          %146 = dma.done [#allocation3], 16
        $region32: #{tpu_custom_call.1} parent=27 // pred_fallthru
          _
        %s147 = sand.u32 %s49, 1
        %s148 = scalar_lea.sflag [#allocation6], %s147
        %s149 = sand.u32 %s49, 1
        %s150 = smul.addr %s149, 8
        %s151 = scalar_lea.vmem [#allocation5], %s150
        // Predicated region
        $region33: #{tpu_custom_call.1} parent=27 // pred_check
          %p152 = pneg %p62
        $region34: #{tpu_custom_call.1} parent=27 // pred_check_branch
          %154 = sbr.rel (%p152) target = $region36
        $region35: #{tpu_custom_call.1} parent=27 // pred_region
          %155 = dma.done %s148, 128
        $region36: #{tpu_custom_call.1} parent=27 // pred_fallthru
          _
        %p156 = pneg %p36
        %p157 = pneg %p33
        %s158 = sand.u32 %s49, 1
        %s159 = scalar_lea.sflag [#allocation6], %s158
        %s160 = sand.u32 %s49, 1
        %s161 = smul.addr %s160, 8
        %s162 = scalar_lea.vmem [#allocation5], %s161
        %p163 = pneg %p62
        %p164 = pneg %p59
        %p165 = pneg %p88
        %p166 = pneg %p85
        %s167 = sand.u32 %s75, 1
        %s168 = scalar_lea.sflag [#allocation4], %s167
        %s169 = sand.u32 %s75, 1
        %s170 = smul.addr %s169, 8
        %s171 = scalar_lea.vmem [#allocation7], %s170
        %v172 = vld [vmem:[%s151] sm:$0xff]
        %v173 = vld [vmem:[#allocation2] sm:$0x1]
        %v175 = vlaneseq
        %v176 = vshrl.u32 %v175, 7
        %v177 = vsub.s32 0, %v176
        %v178 = vrot.slane %v173, %v177
        %v180 = vmul.f32 %v172, %v178
        %181 = vst [vmem:[%s171] sm:$0xff] %v180
        %s182 = sand.u32 %s75, 1
        %s183 = scalar_lea.sflag [#allocation4], %s182
        %s184 = sand.u32 %s75, 1
        %s185 = smul.addr %s184, 8
        %s186 = scalar_lea.vmem [#allocation7], %s185
        // Predicated region
        $region37: #{tpu_custom_call.1} parent=27 // pred_check
          %p187 = pneg %p85
        $region38: #{tpu_custom_call.1} parent=27 // pred_check_branch
          %189 = sbr.rel (%p187) target = $region40
        $region39: #{tpu_custom_call.1} parent=27 // pred_region
          %s191 = ssub.s32 128, 128
          %192 = vsyncadd %s183, %s191
          %s193 = smul.addr %s20, 128
          %s194 = scalar_lea.hbm %s2, %s193
          %s196 = sshll.u32 %s186, 4
          %s197 = int_to_ptr.vmem [resolvable:$true] %s196
          %199 = dma.vmem_to_hbm [thread:$0]  %s197, 128, %s194, %s183
        $region40: #{tpu_custom_call.1} parent=27 // pred_fallthru
          _
      $region28: #{tpu_custom_call.1} parent=5 // pred_fallthru
        _
      %p200 = scmp.le.s32.totalorder 2, %s15
      // Predicated region
      $region41: #{tpu_custom_call.1} parent=5 // pred_check
        %p201 = pneg %p200
      $region42: #{tpu_custom_call.1} parent=5 // pred_check_branch
        %203 = sbr.rel (%p201) target = $region44
      $region43: #{tpu_custom_call.1} parent=5 // pred_region
        %s204 = ssub.s32 %s15, 2
        // Predicated region
        $region45: #{tpu_custom_call.1} parent=43 // pred_check
          %p205 = pneg %p91
        $region46: #{tpu_custom_call.1} parent=43 // pred_check_branch
          %207 = sbr.rel (%p205) target = $region48
        $region47: #{tpu_custom_call.1} parent=43 // pred_region
          %s208 = sand.u32 %s76, 1
          %s209 = scalar_lea.sflag [#allocation4], %s208
          %s210 = sand.u32 %s76, 1
          %s211 = smul.addr %s210, 8
          %s212 = scalar_lea.vmem [#allocation7], %s211
          %213 = dma.done %s209, 128
        $region48: #{tpu_custom_call.1} parent=43 // pred_fallthru
          _
      $region44: #{tpu_custom_call.1} parent=5 // pred_fallthru
        _
    $region6: #{tpu_custom_call.1} parent=1 // loop_footer
      %s19 = sadd.s32 1, %s15
    $region7: #{tpu_custom_call.1} parent=1 // loop_footer_branch
      %14 = sbr.rel target = $region3
    $region8: #{tpu_custom_call.1} parent=1 // loop_exit
      _
    %214 = vsyncpa [#allocation3], 1
    %s215 = scalar_lea.sflag [#allocation3], 1
    %216 = vsyncpa %s215, 1
    %217 = vsyncpa [#allocation6], 1
    %s218 = scalar_lea.sflag [#allocation6], 1
    %219 = vsyncpa %s218, 1
    %220 = vsyncpa [#allocation4], 1
    %s221 = scalar_lea.sflag [#allocation4], 1
    %222 = vsyncpa %s221, 1

</llo_original>
